<compile_context>
chip_gen: v6e
topology: v6e:2x2x1
jax: 0.10.0
libtpu: 0.0.40
codegen_flags: <defaults>
</compile_context>

<pallas_src>
import functools

import jax
import jax.numpy as jnp
from jax import lax
from jax.experimental import pallas as pl
from jax.experimental.pallas import tpu as pltpu


def _silog_kernel(variance_focus, total_rows, block_rows, lane, needs_row_mask,
                  est_ref, gt_ref, mask_ref, loss_ref,
                  sd_ref, sd2_ref, cnt_ref):
    i = pl.program_id(0)

    # Zero the running vreg-shaped accumulators on the first grid step.
    @pl.when(i == 0)
    def _():
        sd_ref[...] = jnp.zeros_like(sd_ref)
        sd2_ref[...] = jnp.zeros_like(sd2_ref)
        cnt_ref[...] = jnp.zeros_like(cnt_ref)

    valid = mask_ref[...] != 0
    if needs_row_mask:
        # Last grid block extends past the array: mask out-of-bounds rows.
        row_ids = i * block_rows + lax.broadcasted_iota(
            jnp.int32, (block_rows, lane), 0)
        valid = jnp.logical_and(valid, row_ids < total_rows)

    # Select before log so garbage / masked-out values never reach log().
    est = jnp.where(valid, est_ref[...].astype(jnp.float32), 1.0)
    gt = jnp.where(valid, gt_ref[...].astype(jnp.float32), 1.0)
    d = jnp.log(est) - jnp.log(gt)          # == 0 where invalid (log(1) = 0)
    v = valid.astype(jnp.float32)

    # (block_rows, 128) -> (block_rows//8, 8, 128): layout-native split, so
    # the axis-0 sums are plain VPU vreg adds (no XLU, no scalar RMW).
    nsub = block_rows // 8
    d3 = d.reshape(nsub, 8, lane)
    v3 = v.reshape(nsub, 8, lane)
    sd_ref[...] += jnp.sum(d3, axis=0)
    sd2_ref[...] += jnp.sum(d3 * d3, axis=0)
    cnt_ref[...] += jnp.sum(v3, axis=0)

    # Finalize: single cross-lane/sublane reduction on the last grid step.
    @pl.when(i == pl.num_programs(0) - 1)
    def _():
        n = jnp.sum(cnt_ref[...])
        mean_d = jnp.sum(sd_ref[...]) / n
        mean_d2 = jnp.sum(sd2_ref[...]) / n
        var = jnp.maximum(mean_d2 - variance_focus * mean_d * mean_d, 0.0)
        loss_ref[...] = (jnp.sqrt(var) * 10.0).reshape(1, 1)


def silog_loss_pallas(depth_est, depth_gt, mask, variance_focus,
                      *, lane=128, max_block_rows=2048):
    """depth_est/depth_gt: NCHW float, mask: NCHW bool. Returns scalar f32."""
    assert depth_est.shape == depth_gt.shape == mask.shape
    assert max_block_rows % 32 == 0  # int8 min tile is (32, 128)
    n_elem = int(depth_est.size)

    # Flatten to 1D (free for contiguous inputs); mask streamed as int8.
    est1 = jnp.asarray(depth_est).reshape(-1)
    gt1 = jnp.asarray(depth_gt).reshape(-1)
    m1 = jnp.asarray(mask).reshape(-1).astype(jnp.int8)

    # Pad only if numel is not a multiple of 8*128 (rare for depth maps).
    align = 8 * lane
    pad = (-n_elem) % align
    if pad:
        est1 = jnp.pad(est1, (0, pad), constant_values=1)
        gt1 = jnp.pad(gt1, (0, pad), constant_values=1)
        m1 = jnp.pad(m1, (0, pad), constant_values=0)

    rows = (n_elem + pad) // lane            # always a multiple of 8
    est2 = est1.reshape(rows, lane)
    gt2 = gt1.reshape(rows, lane)
    m2 = m1.reshape(rows, lane)

    # Whole slab in one block if it fits, else large fixed blocks with the
    # ragged tail handled in-kernel (no extra wrapper-side pad copies).
    block_rows = rows if rows <= max_block_rows else max_block_rows
    grid = (pl.cdiv(rows, block_rows),)
    needs_row_mask = (rows % block_rows) != 0

    tile_spec = pl.BlockSpec((block_rows, lane), lambda i: (i, 0))
    kernel = functools.partial(
        _silog_kernel, float(variance_focus), rows, block_rows, lane,
        needs_row_mask)

    loss = pl.pallas_call(
        kernel,
        out_shape=jax.ShapeDtypeStruct((1, 1), jnp.float32),
        grid_spec=pltpu.PrefetchScalarGridSpec(
            num_scalar_prefetch=0,
            grid=grid,
            in_specs=[tile_spec, tile_spec, tile_spec],
            out_specs=pl.BlockSpec((1, 1), lambda i: (0, 0)),
            scratch_shapes=[
                pltpu.VMEM((8, lane), jnp.float32),  # sum(d)
                pltpu.VMEM((8, lane), jnp.float32),  # sum(d^2)
                pltpu.VMEM((8, lane), jnp.float32),  # count
            ],
        ),
        compiler_params=pltpu.CompilerParams(
            dimension_semantics=("arbitrary",)),
    )(est2, gt2, m2)
    return loss[0, 0]


def silog_loss_ref(depth_est, depth_gt, mask, variance_focus):
    m = mask.astype(jnp.float32)
    d = jnp.where(mask,
                  jnp.log(depth_est.astype(jnp.float32))
                  - jnp.log(depth_gt.astype(jnp.float32)),
                  0.0)
    n = jnp.sum(m)
    mean_d = jnp.sum(d) / n
    mean_d2 = jnp.sum(d * d) / n
    return jnp.sqrt(mean_d2 - variance_focus * mean_d ** 2) * 10.0


if __name__ == "__main__":
    key = jax.random.PRNGKey(0)
    variance_focus = 0.85  # module hyperparameter

    def make_inputs(k, shape):
        k1, k2, k3 = jax.random.split(k, 3)
        est = jax.random.uniform(k1, shape, jnp.float32, minval=0.5, maxval=10.0)
        gt = jax.random.uniform(k2, shape, jnp.float32, minval=0.5, maxval=10.0)
        m = jax.random.uniform(k3, shape, jnp.float32) > 0.3
        return est, gt, m

    k0, k1, k2 = jax.random.split(key, 3)

    # 1) Primary small depth map (single lane-dense block).
    est, gt, m = make_inputs(k0, (2, 1, 64, 64))
    out = jax.block_until_ready(silog_loss_pallas(est, gt, m, variance_focus))
    ref = silog_loss_ref(est, gt, m, variance_focus)
    assert jnp.allclose(out, ref, rtol=1e-5, atol=1e-5), (out, ref)

    # 2) Element count not a multiple of 1024 (exercises the pad fallback).
    est, gt, m = make_inputs(k1, (2, 1, 16, 16))
    out = jax.block_until_ready(silog_loss_pallas(est, gt, m, variance_focus))
    ref = silog_loss_ref(est, gt, m, variance_focus)
    assert jnp.allclose(out, ref, rtol=1e-5, atol=1e-5), (out, ref)

    # 3) Multi-block grid with a partial edge block (in-kernel iota row mask
    #    and cross-step accumulation).
    est, gt, m = make_inputs(k2, (2, 1, 80, 64))
    out = jax.block_until_ready(
        silog_loss_pallas(est, gt, m, variance_focus, max_block_rows=32))
    ref = silog_loss_ref(est, gt, m, variance_focus)
    assert jnp.allclose(out, ref, rtol=1e-5, atol=1e-5), (out, ref)

    print("KERNEL_OK")
</pallas_src>

<mosaic_0001>
module attributes {stable_mosaic.version = 11 : i64} {
  func.func @_silog_kernel(%arg0: i32, %arg1: memref<64x128xf32, #tpu.memory_space<vmem>>, %arg2: memref<64x128xf32, #tpu.memory_space<vmem>>, %arg3: memref<64x128xi8, #tpu.memory_space<vmem>>, %arg4: memref<1x1xf32, #tpu.memory_space<vmem>>, %arg5: memref<8x128xf32, #tpu.memory_space<vmem>>, %arg6: memref<8x128xf32, #tpu.memory_space<vmem>>, %arg7: memref<8x128xf32, #tpu.memory_space<vmem>>) attributes {dimension_semantics = [#tpu.dimension_semantics<arbitrary>], iteration_bounds = array<i64: 1>, scalar_prefetch = 0 : i64, scratch_operands = 3 : i64, tpu.core_type = #tpu.core_type<tc>, window_params = [{transform_indices = @transform_0, window_bounds = array<i64: 64, 128>}, {transform_indices = @transform_1, window_bounds = array<i64: 64, 128>}, {transform_indices = @transform_2, window_bounds = array<i64: 64, 128>}, {pipeline_mode = #tpu.pipeline_mode<synchronous>, transform_indices = @transform_3, window_bounds = array<i64: 1, 1>}]} {
    %c0_i32 = arith.constant 0 : i32
    %0 = arith.cmpi eq, %arg0, %c0_i32 : i32
    %1 = arith.extui %0 : i1 to i32
    %c0_i32_0 = arith.constant 0 : i32
    %2 = arith.cmpi ne, %1, %c0_i32_0 : i32
    scf.if %2 {
      %cst_24 = arith.constant 0.000000e+00 : f32
      %35 = vector.broadcast %cst_24 : f32 to vector<8x128xf32>
      %c0_25 = arith.constant 0 : index
      %c0_26 = arith.constant 0 : index
      %36 = vector.load %arg5[%c0_25, %c0_26] : memref<8x128xf32, #tpu.memory_space<vmem>>, vector<8x128xf32>
      tpu.vector_store %arg5[%c0_25, %c0_26], %35 {strides = array<i32>} : memref<8x128xf32, #tpu.memory_space<vmem>>, vector<8x128xf32>,
      %cst_27 = arith.constant 0.000000e+00 : f32
      %37 = vector.broadcast %cst_27 : f32 to vector<8x128xf32>
      %c0_28 = arith.constant 0 : index
      %c0_29 = arith.constant 0 : index
      %38 = vector.load %arg6[%c0_28, %c0_29] : memref<8x128xf32, #tpu.memory_space<vmem>>, vector<8x128xf32>
      tpu.vector_store %arg6[%c0_28, %c0_29], %37 {strides = array<i32>} : memref<8x128xf32, #tpu.memory_space<vmem>>, vector<8x128xf32>,
      %cst_30 = arith.constant 0.000000e+00 : f32
      %39 = vector.broadcast %cst_30 : f32 to vector<8x128xf32>
      %c0_31 = arith.constant 0 : index
      %c0_32 = arith.constant 0 : index
      %40 = vector.load %arg7[%c0_31, %c0_32] : memref<8x128xf32, #tpu.memory_space<vmem>>, vector<8x128xf32>
      tpu.vector_store %arg7[%c0_31, %c0_32], %39 {strides = array<i32>} : memref<8x128xf32, #tpu.memory_space<vmem>>, vector<8x128xf32>,
    } else {
    }
    %c0 = arith.constant 0 : index
    %c0_1 = arith.constant 0 : index
    %3 = vector.load %arg3[%c0, %c0_1] : memref<64x128xi8, #tpu.memory_space<vmem>>, vector<64x128xi8>
    %c0_i8 = arith.constant 0 : i8
    %4 = vector.broadcast %c0_i8 : i8 to vector<64x128xi8>
    %5 = arith.cmpi ne, %3, %4 : vector<64x128xi8>
    %c0_2 = arith.constant 0 : index
    %c0_3 = arith.constant 0 : index
    %6 = vector.load %arg1[%c0_2, %c0_3] : memref<64x128xf32, #tpu.memory_space<vmem>>, vector<64x128xf32>
    %cst = arith.constant 1.000000e+00 : f32
    %7 = vector.broadcast %cst : f32 to vector<64x128xf32>
    %8 = arith.select %5, %6, %7 : vector<64x128xi1>, vector<64x128xf32>
    %c0_4 = arith.constant 0 : index
    %c0_5 = arith.constant 0 : index
    %9 = vector.load %arg2[%c0_4, %c0_5] : memref<64x128xf32, #tpu.memory_space<vmem>>, vector<64x128xf32>
    %cst_6 = arith.constant 1.000000e+00 : f32
    %10 = vector.broadcast %cst_6 : f32 to vector<64x128xf32>
    %11 = arith.select %5, %9, %10 : vector<64x128xi1>, vector<64x128xf32>
    %12 = math.log %8 : vector<64x128xf32>
    %13 = math.log %11 : vector<64x128xf32>
    %14 = arith.subf %12, %13 : vector<64x128xf32>
    %15 = arith.extui %5 : vector<64x128xi1> to vector<64x128xi32>
    %16 = arith.sitofp %15 : vector<64x128xi32> to vector<64x128xf32>
    %17 = vector.shape_cast %14 : vector<64x128xf32> to vector<8x8x128xf32>
    %18 = vector.shape_cast %16 : vector<64x128xf32> to vector<8x8x128xf32>
    %c0_7 = arith.constant 0 : index
    %c0_8 = arith.constant 0 : index
    %19 = vector.load %arg5[%c0_7, %c0_8] : memref<8x128xf32, #tpu.memory_space<vmem>>, vector<8x128xf32>
    %cst_9 = arith.constant dense<0.000000e+00> : vector<8x128xf32>
    %20 = vector.multi_reduction <add>, %17, %cst_9 [0] : vector<8x8x128xf32> to vector<8x128xf32>
    %21 = arith.addf %19, %20 : vector<8x128xf32>
    %c0_10 = arith.constant 0 : index
    %c0_11 = arith.constant 0 : index
    %22 = vector.load %arg5[%c0_10, %c0_11] : memref<8x128xf32, #tpu.memory_space<vmem>>, vector<8x128xf32>
    tpu.vector_store %arg5[%c0_10, %c0_11], %21 {strides = array<i32>} : memref<8x128xf32, #tpu.memory_space<vmem>>, vector<8x128xf32>,
    %c0_12 = arith.constant 0 : index
    %c0_13 = arith.constant 0 : index
    %23 = vector.load %arg6[%c0_12, %c0_13] : memref<8x128xf32, #tpu.memory_space<vmem>>, vector<8x128xf32>
    %24 = arith.mulf %17, %17 : vector<8x8x128xf32>
    %cst_14 = arith.constant dense<0.000000e+00> : vector<8x128xf32>
    %25 = vector.multi_reduction <add>, %24, %cst_14 [0] : vector<8x8x128xf32> to vector<8x128xf32>
    %26 = arith.addf %23, %25 : vector<8x128xf32>
    %c0_15 = arith.constant 0 : index
    %c0_16 = arith.constant 0 : index
    %27 = vector.load %arg6[%c0_15, %c0_16] : memref<8x128xf32, #tpu.memory_space<vmem>>, vector<8x128xf32>
    tpu.vector_store %arg6[%c0_15, %c0_16], %26 {strides = array<i32>} : memref<8x128xf32, #tpu.memory_space<vmem>>, vector<8x128xf32>,
    %c0_17 = arith.constant 0 : index
    %c0_18 = arith.constant 0 : index
    %28 = vector.load %arg7[%c0_17, %c0_18] : memref<8x128xf32, #tpu.memory_space<vmem>>, vector<8x128xf32>
    %cst_19 = arith.constant dense<0.000000e+00> : vector<8x128xf32>
    %29 = vector.multi_reduction <add>, %18, %cst_19 [0] : vector<8x8x128xf32> to vector<8x128xf32>
    %30 = arith.addf %28, %29 : vector<8x128xf32>
    %c0_20 = arith.constant 0 : index
    %c0_21 = arith.constant 0 : index
    %31 = vector.load %arg7[%c0_20, %c0_21] : memref<8x128xf32, #tpu.memory_space<vmem>>, vector<8x128xf32>
    tpu.vector_store %arg7[%c0_20, %c0_21], %30 {strides = array<i32>} : memref<8x128xf32, #tpu.memory_space<vmem>>, vector<8x128xf32>,
    %c0_i32_22 = arith.constant 0 : i32
    %32 = arith.cmpi eq, %arg0, %c0_i32_22 : i32
    %33 = arith.extui %32 : i1 to i32
    %c0_i32_23 = arith.constant 0 : i32
    %34 = arith.cmpi ne, %33, %c0_i32_23 : i32
    scf.if %34 {
      %c0_24 = arith.constant 0 : index
      %c0_25 = arith.constant 0 : index
      %35 = vector.load %arg7[%c0_24, %c0_25] : memref<8x128xf32, #tpu.memory_space<vmem>>, vector<8x128xf32>
      %36 = vector.shape_cast %35 : vector<8x128xf32> to vector<1x8x128xf32>
      %cst_26 = arith.constant dense<0.000000e+00> : vector<1xf32>
      %37 = vector.multi_reduction <add>, %36, %cst_26 [1, 2] : vector<1x8x128xf32> to vector<1xf32>
      %38 = vector.shape_cast %37 : vector<1xf32> to vector<1x1x1xf32>
      %39 = vector.extract %38[0, 0, 0] : f32 from vector<1x1x1xf32>
      %c0_27 = arith.constant 0 : index
      %c0_28 = arith.constant 0 : index
      %40 = vector.load %arg5[%c0_27, %c0_28] : memref<8x128xf32, #tpu.memory_space<vmem>>, vector<8x128xf32>
      %41 = vector.shape_cast %40 : vector<8x128xf32> to vector<1x8x128xf32>
      %cst_29 = arith.constant dense<0.000000e+00> : vector<1xf32>
      %42 = vector.multi_reduction <add>, %41, %cst_29 [1, 2] : vector<1x8x128xf32> to vector<1xf32>
      %43 = vector.shape_cast %42 : vector<1xf32> to vector<1x1x1xf32>
      %44 = vector.extract %43[0, 0, 0] : f32 from vector<1x1x1xf32>
      %45 = arith.divf %44, %39 : f32
      %c0_30 = arith.constant 0 : index
      %c0_31 = arith.constant 0 : index
      %46 = vector.load %arg6[%c0_30, %c0_31] : memref<8x128xf32, #tpu.memory_space<vmem>>, vector<8x128xf32>
      %47 = vector.shape_cast %46 : vector<8x128xf32> to vector<1x8x128xf32>
      %cst_32 = arith.constant dense<0.000000e+00> : vector<1xf32>
      %48 = vector.multi_reduction <add>, %47, %cst_32 [1, 2] : vector<1x8x128xf32> to vector<1xf32>
      %49 = vector.shape_cast %48 : vector<1xf32> to vector<1x1x1xf32>
      %50 = vector.extract %49[0, 0, 0] : f32 from vector<1x1x1xf32>
      %51 = arith.divf %50, %39 : f32
      %cst_33 = arith.constant 8.500000e-01 : f32
      %52 = arith.mulf %cst_33, %45 : f32
      %53 = arith.mulf %52, %45 : f32
      %54 = arith.subf %51, %53 : f32
      %cst_34 = arith.constant 0.000000e+00 : f32
      %55 = arith.maximumf %54, %cst_34 : f32
      %56 = math.sqrt %55 : f32
      %cst_35 = arith.constant 1.000000e+01 : f32
      %57 = arith.mulf %56, %cst_35 : f32
      %58 = vector.broadcast %57 : f32 to vector<1x1xf32>
      %c0_36 = arith.constant 0 : index
      %c0_37 = arith.constant 0 : index
      %59 = vector.load %arg4[%c0_36, %c0_37] : memref<1x1xf32, #tpu.memory_space<vmem>>, vector<1x1xf32>
      tpu.vector_store %arg4[%c0_36, %c0_37], %58 {strides = array<i32>} : memref<1x1xf32, #tpu.memory_space<vmem>>, vector<1x1xf32>,
    } else {
    }
    return
  }
  func.func @transform_0(%arg0: i32) -> (i32, i32) {
    %c0_i32 = arith.constant 0 : i32
    %c0_i32_0 = arith.constant 0 : i32
    return %arg0, %c0_i32 : i32, i32
  }
  func.func @transform_1(%arg0: i32) -> (i32, i32) {
    %c0_i32 = arith.constant 0 : i32
    %c0_i32_0 = arith.constant 0 : i32
    return %arg0, %c0_i32 : i32, i32
  }
  func.func @transform_2(%arg0: i32) -> (i32, i32) {
    %c0_i32 = arith.constant 0 : i32
    %c0_i32_0 = arith.constant 0 : i32
    return %arg0, %c0_i32 : i32, i32
  }
  func.func @transform_3(%arg0: i32) -> (i32, i32) {
    %c0_i32 = arith.constant 0 : i32
    %c0_i32_0 = arith.constant 0 : i32
    %c0_i32_1 = arith.constant 0 : i32
    return %c0_i32, %c0_i32_0 : i32, i32
  }
}

</mosaic_0001>

<llo_original>
// kernel: tpu_custom_call.1
$region0: #{tpu_custom_call.1}
  #allocation0 [shape = 'u32[]', space=smem, size = 0x4, offset = 0x4, fixed_abs, tag = 'smem constant byte address 0x4 - core index']
  #allocation1 [shape = 'u32[144,128]{1,0:T(1,128)}', space=vmem, size = 0x12000, scoped, tag = 'internal scratch']
  #allocation2 [shape = 'f32[8,128]{1,0:T(8,128)}', space=vmem, size = 0x1000, scoped, tag = 'scratch operand']
  #allocation3 [shape = 'f32[8,128]{1,0:T(8,128)}', space=vmem, size = 0x1000, scoped, tag = 'scratch operand']
  #allocation4 [shape = 'f32[8,128]{1,0:T(8,128)}', space=vmem, size = 0x1000, scoped, tag = 'scratch operand']
  %s0 = inlined_call_operand.hbm [shape: f32[64,128], index: 0, kind: input, shape index: {}]
  %s1 = inlined_call_operand.hbm [shape: f32[64,128], index: 1, kind: input, shape index: {}]
  %s2 = inlined_call_operand.hbm [shape: s8[64,128], index: 2, kind: input, shape index: {}]
  %s3 = inlined_call_operand.hbm [shape: f32[1,1], index: 3, kind: output, shape index: {}]
  %s4 = sld [smem:[#allocation0]]
  $region42: #{tpu_custom_call.1} parent=0
    _
  %s6 = ssub.s32 1, %s4
  %s7 = scalar_select 0, %s6, %s4
  $region1: #{tpu_custom_call.1} parent=0
    #allocation5 [shape = 'u8[32768]{0}', space=vmem, size = 0x8000, scoped, tag = 'input window, operand 0, single buffered']
    #allocation6 [shape = 's32[1]{0}', space=sflag, size = 0x4, scoped, tag = 'scoped memory for tpu_custom_call.1']
    #allocation7 [shape = 's32[1]{0}', space=sflag, size = 0x4, scoped, tag = 'scoped memory for tpu_custom_call.1']
    #allocation8 [shape = 'u8[32768]{0}', space=vmem, size = 0x8000, scoped, tag = 'input window, operand 1, single buffered']
    #allocation9 [shape = 's32[1]{0}', space=sflag, size = 0x4, scoped, tag = 'scoped memory for tpu_custom_call.1']
    #allocation10 [shape = 'u8[8192]{0}', space=vmem, size = 0x2000, scoped, tag = 'input window, operand 2, single buffered']
    #allocation11 [shape = 'u8[512]{0}', space=vmem, size = 0x400, scoped, tag = 'output window, operand 0, single buffered']
    %8 = vsyncpa [#allocation6], 0
    %9 = vsyncpa [#allocation9], 0
    %10 = vsyncpa [#allocation7], 0
    // Predicated region
    $region2: #{tpu_custom_call.1} parent=1 // pred_check
      _
    $region3: #{tpu_custom_call.1} parent=1 // pred_check_branch
      %12 = sbr.rel (0) target = $region5
    $region4: #{tpu_custom_call.1} parent=1 // pred_region
      %s14 = ssub.s32 1024, 1024
      %15 = vsyncadd [#allocation6], %s14
      %s16 = sshll.u32 [#allocation5], 4
      %s17 = int_to_ptr.vmem [resolvable:$true] %s16
      %22 = dma.hbm_to_vmem [thread:$0]  %s0, 1024, %s17, [#allocation6], 128, 128, 8
    $region5: #{tpu_custom_call.1} parent=1 // pred_fallthru
      _
    // Predicated region
    $region6: #{tpu_custom_call.1} parent=1 // pred_check
      _
    $region7: #{tpu_custom_call.1} parent=1 // pred_check_branch
      %24 = sbr.rel (0) target = $region9
    $region8: #{tpu_custom_call.1} parent=1 // pred_region
      %s26 = ssub.s32 1024, 1024
      %27 = vsyncadd [#allocation9], %s26
      %s28 = sshll.u32 [#allocation8], 4
      %s29 = int_to_ptr.vmem [resolvable:$true] %s28
      %34 = dma.hbm_to_vmem [thread:$0]  %s1, 1024, %s29, [#allocation9], 128, 128, 8
    $region9: #{tpu_custom_call.1} parent=1 // pred_fallthru
      _
    // Predicated region
    $region10: #{tpu_custom_call.1} parent=1 // pred_check
      _
    $region11: #{tpu_custom_call.1} parent=1 // pred_check_branch
      %36 = sbr.rel (0) target = $region13
    $region12: #{tpu_custom_call.1} parent=1 // pred_region
      %s38 = ssub.s32 256, 256
      %39 = vsyncadd [#allocation9], %s38
      %s40 = sshll.u32 [#allocation10], 4
      %s41 = int_to_ptr.vmem [resolvable:$true] %s40
      %46 = dma.hbm_to_vmem [thread:$0]  %s2, 256, %s41, [#allocation9], 128, 128, 8
    $region13: #{tpu_custom_call.1} parent=1 // pred_fallthru
      _
    // Predicated region
    $region14: #{tpu_custom_call.1} parent=1 // pred_check
      _
    $region15: #{tpu_custom_call.1} parent=1 // pred_check_branch
      %48 = sbr.rel (0) target = $region17
    $region16: #{tpu_custom_call.1} parent=1 // pred_region
      %49 = dma.done [#allocation6], 1024
    $region17: #{tpu_custom_call.1} parent=1 // pred_fallthru
      _
    // Predicated region
    $region18: #{tpu_custom_call.1} parent=1 // pred_check
      _
    $region19: #{tpu_custom_call.1} parent=1 // pred_check_branch
      %51 = sbr.rel (0) target = $region21
    $region20: #{tpu_custom_call.1} parent=1 // pred_region
      %52 = dma.done [#allocation9], 1024
    $region21: #{tpu_custom_call.1} parent=1 // pred_fallthru
      _
    // Predicated region
    $region22: #{tpu_custom_call.1} parent=1 // pred_check
      _
    $region23: #{tpu_custom_call.1} parent=1 // pred_check_branch
      %54 = sbr.rel (0) target = $region25
    $region24: #{tpu_custom_call.1} parent=1 // pred_region
      %55 = dma.done [#allocation9], 256
    $region25: #{tpu_custom_call.1} parent=1 // pred_fallthru
      _
    %p58 = scmp.eq.s32.totalorder 0, 0
    // Predicated region
    $region26: #{tpu_custom_call.1} parent=1 // pred_check
      %p59 = pneg %p58
    $region27: #{tpu_custom_call.1} parent=1 // pred_check_branch
      %61 = sbr.rel (%p59) target = $region29
    $region28: #{tpu_custom_call.1} parent=1 // pred_region
      %62 = vst [vmem:[#allocation2] sm:$0xff] 0.0
      %63 = vst [vmem:[#allocation3] sm:$0xff] 0.0
      %64 = vst [vmem:[#allocation4] sm:$0xff] 0.0
    $region29: #{tpu_custom_call.1} parent=1 // pred_fallthru
      _
    %v65 = vld [vmem:[#allocation10] sm:$0xff]
    %v66 = vld [vmem:[#allocation10 + $0x8] sm:$0xff]
    %vm67 = vnez %v65
    %vm68 = vnez %v66
    %v69 = vld [vmem:[#allocation5] sm:$0xff]
    %v70 = vld [vmem:[#allocation5 + $0x8] sm:$0xff]
    %v71 = vld [vmem:[#allocation5 + $0x10] sm:$0xff]
    %v72 = vld [vmem:[#allocation5 + $0x18] sm:$0xff]
    %v73 = vld [vmem:[#allocation5 + $0x20] sm:$0xff]
    %v74 = vld [vmem:[#allocation5 + $0x28] sm:$0xff]
    %v75 = vld [vmem:[#allocation5 + $0x30] sm:$0xff]
    %v76 = vld [vmem:[#allocation5 + $0x38] sm:$0xff]
    %v77 = vsel %vm67, 16843009, 0
    %v78 = vsel %vm68, 16843009, 0
    %v79 = vunpack.c.0.s8 %v77
    %v80 = vunpack.c.1.s8 %v77
    %v81 = vunpack.c.2.s8 %v77
    %v82 = vunpack.c.3.s8 %v77
    %v83 = vunpack.c.0.s8 %v78
    %v84 = vunpack.c.1.s8 %v78
    %v85 = vunpack.c.2.s8 %v78
    %v86 = vunpack.c.3.s8 %v78
    %v87 = vpack.c.b16 %v79, %v79
    %v88 = vpack.c.b8 %v87, %v87
    %v89 = vpack.c.b16 %v80, %v80
    %v90 = vpack.c.b8 %v89, %v89
    %v91 = vpack.c.b16 %v81, %v81
    %v92 = vpack.c.b8 %v91, %v91
    %v93 = vpack.c.b16 %v82, %v82
    %v94 = vpack.c.b8 %v93, %v93
    %v95 = vpack.c.b16 %v83, %v83
    %v96 = vpack.c.b8 %v95, %v95
    %v97 = vpack.c.b16 %v84, %v84
    %v98 = vpack.c.b8 %v97, %v97
    %v99 = vpack.c.b16 %v85, %v85
    %v100 = vpack.c.b8 %v99, %v99
    %v101 = vpack.c.b16 %v86, %v86
    %v102 = vpack.c.b8 %v101, %v101
    %vm103 = vnez %v88
    %vm104 = vnez %v90
    %vm105 = vnez %v92
    %vm106 = vnez %v94
    %vm107 = vnez %v96
    %vm108 = vnez %v98
    %vm109 = vnez %v100
    %vm110 = vnez %v102
    %v111 = vsel %vm103, 16843009, 0
    %v112 = vsel %vm104, 16843009, 0
    %v113 = vsel %vm105, 16843009, 0
    %v114 = vsel %vm106, 16843009, 0
    %v115 = vsel %vm107, 16843009, 0
    %v116 = vsel %vm108, 16843009, 0
    %v117 = vsel %vm109, 16843009, 0
    %v118 = vsel %vm110, 16843009, 0
    %v119 = vunpack.c.0.s8 %v111
    %v120 = vunpack.c.0.s8 %v112
    %v121 = vunpack.c.0.s8 %v113
    %v122 = vunpack.c.0.s8 %v114
    %v123 = vunpack.c.0.s8 %v115
    %v124 = vunpack.c.0.s8 %v116
    %v125 = vunpack.c.0.s8 %v117
    %v126 = vunpack.c.0.s8 %v118
    %vm127 = vcmp.ne.s32.totalorder %v119, 0
    %vm128 = vcmp.ne.s32.totalorder %v120, 0
    %vm129 = vcmp.ne.s32.totalorder %v121, 0
    %vm130 = vcmp.ne.s32.totalorder %v122, 0
    %vm131 = vcmp.ne.s32.totalorder %v123, 0
    %vm132 = vcmp.ne.s32.totalorder %v124, 0
    %vm133 = vcmp.ne.s32.totalorder %v125, 0
    %vm134 = vcmp.ne.s32.totalorder %v126, 0
    %v135 = vsel %vm127, %v69, 1.0
    %v136 = vsel %vm128, %v70, 1.0
    %v137 = vsel %vm129, %v71, 1.0
    %v138 = vsel %vm130, %v72, 1.0
    %v139 = vsel %vm131, %v73, 1.0
    %v140 = vsel %vm132, %v74, 1.0
    %v141 = vsel %vm133, %v75, 1.0
    %v142 = vsel %vm134, %v76, 1.0
    %v143 = vld [vmem:[#allocation8] sm:$0xff]
    %v144 = vld [vmem:[#allocation8 + $0x8] sm:$0xff]
    %v145 = vld [vmem:[#allocation8 + $0x10] sm:$0xff]
    %v146 = vld [vmem:[#allocation8 + $0x18] sm:$0xff]
    %v147 = vld [vmem:[#allocation8 + $0x20] sm:$0xff]
    %v148 = vld [vmem:[#allocation8 + $0x28] sm:$0xff]
    %v149 = vld [vmem:[#allocation8 + $0x30] sm:$0xff]
    %v150 = vld [vmem:[#allocation8 + $0x38] sm:$0xff]
    %v151 = vsel %vm127, %v143, 1.0
    %v152 = vsel %vm128, %v144, 1.0
    %v153 = vsel %vm129, %v145, 1.0
    %v154 = vsel %vm130, %v146, 1.0
    %v155 = vsel %vm131, %v147, 1.0
    %v156 = vsel %vm132, %v148, 1.0
    %v157 = vsel %vm133, %v149, 1.0
    %v158 = vsel %vm134, %v150, 1.0
    %v159 = vlog2.pop %v135
    %v160 = vmul.f32 %v159, 0.6931472
    %v161 = vlog2.pop %v136
    %v162 = vmul.f32 %v161, 0.6931472
    %v163 = vlog2.pop %v137
    %v164 = vmul.f32 %v163, 0.6931472
    %v165 = vlog2.pop %v138
    %v166 = vmul.f32 %v165, 0.6931472
    %v167 = vlog2.pop %v139
    %v168 = vmul.f32 %v167, 0.6931472
    %v169 = vlog2.pop %v140
    %v170 = vmul.f32 %v169, 0.6931472
    %v171 = vlog2.pop %v141
    %v172 = vmul.f32 %v171, 0.6931472
    %v173 = vlog2.pop %v142
    %v174 = vmul.f32 %v173, 0.6931472
    %v175 = vlog2.pop %v151
    %v176 = vmul.f32 %v175, 0.6931472
    %v177 = vlog2.pop %v152
    %v178 = vmul.f32 %v177, 0.6931472
    %v179 = vlog2.pop %v153
    %v180 = vmul.f32 %v179, 0.6931472
    %v181 = vlog2.pop %v154
    %v182 = vmul.f32 %v181, 0.6931472
    %v183 = vlog2.pop %v155
    %v184 = vmul.f32 %v183, 0.6931472
    %v185 = vlog2.pop %v156
    %v186 = vmul.f32 %v185, 0.6931472
    %v187 = vlog2.pop %v157
    %v188 = vmul.f32 %v187, 0.6931472
    %v189 = vlog2.pop %v158
    %v190 = vmul.f32 %v189, 0.6931472
    %v191 = vsub.f32 %v160, %v176
    %v192 = vsub.f32 %v162, %v178
    %v193 = vsub.f32 %v164, %v180
    %v194 = vsub.f32 %v166, %v182
    %v195 = vsub.f32 %v168, %v184
    %v196 = vsub.f32 %v170, %v186
    %v197 = vsub.f32 %v172, %v188
    %v198 = vsub.f32 %v174, %v190
    %v199 = vsel %vm127, 1, 0
    %v200 = vsel %vm128, 1, 0
    %v201 = vsel %vm129, 1, 0
    %v202 = vsel %vm130, 1, 0
    %v203 = vsel %vm131, 1, 0
    %v204 = vsel %vm132, 1, 0
    %v205 = vsel %vm133, 1, 0
    %v206 = vsel %vm134, 1, 0
    %v207 = vcvt.s32.f32 %v199
    %v208 = vcvt.s32.f32 %v200
    %v209 = vcvt.s32.f32 %v201
    %v210 = vcvt.s32.f32 %v202
    %v211 = vcvt.s32.f32 %v203
    %v212 = vcvt.s32.f32 %v204
    %v213 = vcvt.s32.f32 %v205
    %v214 = vcvt.s32.f32 %v206
    %v215 = vld [vmem:[#allocation2] sm:$0xff]
    %v216 = vadd.f32 %v191, %v192
    %v217 = vadd.f32 %v216, %v193
    %v218 = vadd.f32 %v217, %v194
    %v219 = vadd.f32 %v218, %v195
    %v220 = vadd.f32 %v219, %v196
    %v221 = vadd.f32 %v220, %v197
    %v222 = vadd.f32 %v221, %v198
    %v223 = vadd.f32 %v215, %v222
    %224 = vst [vmem:[#allocation2] sm:$0xff] %v223
    %v225 = vld [vmem:[#allocation3] sm:$0xff]
    %v226 = vmul.f32 %v191, %v191
    %v227 = vmul.f32 %v192, %v192
    %v228 = vmul.f32 %v193, %v193
    %v229 = vmul.f32 %v194, %v194
    %v230 = vmul.f32 %v195, %v195
    %v231 = vmul.f32 %v196, %v196
    %v232 = vmul.f32 %v197, %v197
    %v233 = vmul.f32 %v198, %v198
    %v234 = vadd.f32 %v226, %v227
    %v235 = vadd.f32 %v234, %v228
    %v236 = vadd.f32 %v235, %v229
    %v237 = vadd.f32 %v236, %v230
    %v238 = vadd.f32 %v237, %v231
    %v239 = vadd.f32 %v238, %v232
    %v240 = vadd.f32 %v239, %v233
    %v241 = vadd.f32 %v225, %v240
    %242 = vst [vmem:[#allocation3] sm:$0xff] %v241
    %v243 = vld [vmem:[#allocation4] sm:$0xff]
    %v244 = vadd.f32 %v207, %v208
    %v245 = vadd.f32 %v244, %v209
    %v246 = vadd.f32 %v245, %v210
    %v247 = vadd.f32 %v246, %v211
    %v248 = vadd.f32 %v247, %v212
    %v249 = vadd.f32 %v248, %v213
    %v250 = vadd.f32 %v249, %v214
    %v251 = vadd.f32 %v243, %v250
    %252 = vst [vmem:[#allocation4] sm:$0xff] %v251
    // Predicated region
    $region30: #{tpu_custom_call.1} parent=1 // pred_check
      %p253 = pneg %p58
    $region31: #{tpu_custom_call.1} parent=1 // pred_check_branch
      %255 = sbr.rel (%p253) target = $region33
    $region32: #{tpu_custom_call.1} parent=1 // pred_region
      %v256 = vld [vmem:[#allocation4] sm:$0xff]
      %257 = vadd.xlane.f32.xlu0 %v256
      %v258 = vpop.xlane.xlu0 %257
      %v259 = vrot.slane %v258, 4
      %v260 = vadd.f32 %v258, %v259
      %v261 = vrot.slane %v260, 2
      %v262 = vadd.f32 %v260, %v261
      %v263 = vrot.slane %v262, 1
      %v264 = vadd.f32 %v262, %v263
      %s265 = vtos %v264
      %v266 = vld [vmem:[#allocation2] sm:$0xff]
      %267 = vadd.xlane.f32.xlu0 %v266
      %v268 = vpop.xlane.xlu0 %267
      %v269 = vrot.slane %v268, 4
      %v270 = vadd.f32 %v268, %v269
      %v271 = vrot.slane %v270, 2
      %v272 = vadd.f32 %v270, %v271
      %v273 = vrot.slane %v272, 1
      %v274 = vadd.f32 %v272, %v273
      %s275 = vtos %v274
      %v276 = vstv %s265
      %v277 = vrcp.pop %v276
      %s278 = vtos %v277
      %s279 = smul.f32 %s275, %s278
      %v280 = vld [vmem:[#allocation3] sm:$0xff]
      %281 = vadd.xlane.f32.xlu0 %v280
      %v282 = vpop.xlane.xlu0 %281
      %v283 = vrot.slane %v282, 4
      %v284 = vadd.f32 %v282, %v283
      %v285 = vrot.slane %v284, 2
      %v286 = vadd.f32 %v284, %v285
      %v287 = vrot.slane %v286, 1
      %v288 = vadd.f32 %v286, %v287
      %s289 = vtos %v288
      %v290 = vstv %s265
      %v291 = vrcp.pop %v290
      %s292 = vtos %v291
      %s293 = smul.f32 %s289, %s292
      %s294 = smul.f32 %s279, 0.85
      %s295 = smul.f32 %s294, %s279
      %s296 = ssub.f32 %s293, %s295
      %s297 = smax.f32 %s296, 0.0
      %v298 = vstv %s297
      %v299 = vrsqrt.pop %v298
      %v300 = vmul.f32 %v298, %v299
      %vm301 = vcmp.eq.f32.partialorder %v298, inf
      %v302 = vsel %vm301, %v298, %v300
      %vm303 = vcmp.eq.f32.partialorder %v298, 0.0
      %v304 = vand.u32 %v298, 2147483648
      %v305 = vsel %vm303, %v304, %v302
      %s306 = vtos %v305
      %s307 = smul.f32 %s306, 10.0
      %v308 = vstv %s307
      %vm309 = vcmask 0
      %310 = vst.msk [vmem:[#allocation11] sm:$0x1] %vm309, %v308
    $region33: #{tpu_custom_call.1} parent=1 // pred_fallthru
      _
    // Predicated region
    $region34: #{tpu_custom_call.1} parent=1 // pred_check
      _
    $region35: #{tpu_custom_call.1} parent=1 // pred_check_branch
      %312 = sbr.rel (0) target = $region37
    $region36: #{tpu_custom_call.1} parent=1 // pred_region
      %s314 = ssub.s32 16, 16
      %315 = vsyncadd [#allocation7], %s314
      %s317 = sshll.u32 [#allocation11], 4
      %s318 = int_to_ptr.vmem [resolvable:$true] %s317
      %320 = dma.vmem_to_hbm [thread:$0]  %s318, 16, %s3, [#allocation7]
    $region37: #{tpu_custom_call.1} parent=1 // pred_fallthru
      _
    // Predicated region
    $region38: #{tpu_custom_call.1} parent=1 // pred_check
      _
    $region39: #{tpu_custom_call.1} parent=1 // pred_check_branch
      %322 = sbr.rel (0) target = $region41
    $region40: #{tpu_custom_call.1} parent=1 // pred_region
      %323 = dma.done [#allocation7], 16
    $region41: #{tpu_custom_call.1} parent=1 // pred_fallthru
      _
    %324 = vsyncpa [#allocation6], 1
    %325 = vsyncpa [#allocation9], 1
    %326 = vsyncpa [#allocation7], 1

</llo_original>
